<compile_context>
chip_gen: v7x
topology: tpu7x:2x2x1
jax: 0.10.0
libtpu: 0.0.40
codegen_flags: <defaults>
</compile_context>

<pallas_src>
import numpy as np

import jax
import jax.numpy as jnp
from jax.experimental import pallas as pl
from jax.experimental.pallas import tpu as pltpu


_LANE = 128          # lane width of a vreg
_MAX_ROWS = 1024     # max sublane-rows per block -> 1024*128*4B = 512 KiB f32 tile


def _cdiv(a, b):
    return -(-a // b)


def _pack_geometry(d):
    """Logical feature size D -> (R, Dp) with Dp = R*128 the padded feature size."""
    r = _cdiv(d, _LANE)
    return r, r * _LANE


def _tiling(r):
    """Rows per block and lane-grid size for a packed (R, 128) feature view."""
    rb = r if r <= _MAX_ROWS else _MAX_ROWS   # full dim or a multiple-of-8 block
    return rb, _cdiv(r, rb)


# ----------------------------- Pallas kernels --------------------------------

def _bmul_kernel(x_ref, m_ref, o_ref):
    # out = x * mask   (mask shared across the batch grid axis)
    o_ref[...] = (x_ref[...] * m_ref[...]).astype(o_ref.dtype)


def _fused_mag_bmul_kernel(t_ref, x_ref, m_ref, mag_ref, o_ref, magout_ref):
    # Single pass over x:
    #   out = x * mask
    #   mag = (t * mag + mean_over_batch(|x|)) / (t + 1)
    # Batch is the innermost ("arbitrary") grid axis; magout is the resident
    # accumulator across it.
    b = pl.program_id(1)
    nb = pl.num_programs(1)

    @pl.when(b == 0)
    def _init():
        magout_ref[...] = jnp.zeros_like(magout_ref)

    xv = x_ref[...]
    o_ref[...] = (xv * m_ref[...]).astype(o_ref.dtype)
    magout_ref[...] += jnp.abs(xv).astype(jnp.float32)

    @pl.when(b == nb - 1)
    def _finalize():
        t = t_ref[0]
        a = magout_ref[...] / nb                       # mean over batch
        magout_ref[...] = (t * mag_ref[...] + a) / (t + 1.0)


def _mag_update_kernel(t_ref, x_ref, mag_ref, magout_ref):
    # Standalone running-average magnitude update (used right before a mask
    # refresh, since the threshold sort depends on the updated magnitude).
    b = pl.program_id(1)
    nb = pl.num_programs(1)

    @pl.when(b == 0)
    def _init():
        magout_ref[...] = jnp.zeros_like(magout_ref)

    magout_ref[...] += jnp.abs(x_ref[...]).astype(jnp.float32)

    @pl.when(b == nb - 1)
    def _finalize():
        t = t_ref[0]
        magout_ref[...] = (t * mag_ref[...] + magout_ref[...] / nb) / (t + 1.0)


def _make_mask_kernel(thr_ref, imp_ref, mask_ref):
    # mask = importance >= threshold
    mask_ref[...] = (imp_ref[...] >= thr_ref[0]).astype(jnp.float32)


# ----------------------------- kernel wrappers --------------------------------

def broadcast_mul(x3, mask_rc):
    """x3: (N, R, 128), mask_rc: (R, 128) -> x3 * mask."""
    n, r, lane = x3.shape
    rb, gj = _tiling(r)
    return pl.pallas_call(
        _bmul_kernel,
        out_shape=jax.ShapeDtypeStruct((n, r, lane), x3.dtype),
        grid=(gj, n),
        in_specs=[pl.BlockSpec((pl.Squeezed(), rb, lane), lambda j, b: (b, j, 0)),
                  pl.BlockSpec((rb, lane), lambda j, b: (j, 0))],
        out_specs=pl.BlockSpec((pl.Squeezed(), rb, lane), lambda j, b: (b, j, 0)),
        compiler_params=pltpu.CompilerParams(
            dimension_semantics=("parallel", "parallel")),
    )(x3, mask_rc)


def fused_mag_update_and_mul(t, x3, mask_rc, mag_rc):
    """One pass over x: returns (x*mask, updated running-average magnitude)."""
    n, r, lane = x3.shape
    rb, gj = _tiling(r)
    t_arr = jnp.asarray([t], jnp.float32)
    # NOTE: input_output_aliases={3: 0 or 1} could donate the magnitude buffer
    # in place; omitted to keep eager (non-jit) execution free of donation
    # caveats — the saved traffic is tiny relative to the x stream anyway.
    return pl.pallas_call(
        _fused_mag_bmul_kernel,
        out_shape=(jax.ShapeDtypeStruct((n, r, lane), x3.dtype),
                   jax.ShapeDtypeStruct((r, lane), jnp.float32)),
        grid=(gj, n),
        in_specs=[pl.BlockSpec(memory_space=pltpu.MemorySpace.SMEM),
                  pl.BlockSpec((pl.Squeezed(), rb, lane), lambda j, b: (b, j, 0)),
                  pl.BlockSpec((rb, lane), lambda j, b: (j, 0)),
                  pl.BlockSpec((rb, lane), lambda j, b: (j, 0))],
        out_specs=(pl.BlockSpec((pl.Squeezed(), rb, lane), lambda j, b: (b, j, 0)),
                   pl.BlockSpec((rb, lane), lambda j, b: (j, 0))),
        compiler_params=pltpu.CompilerParams(
            dimension_semantics=("parallel", "arbitrary")),
    )(t_arr, x3, mask_rc, mag_rc)


def magnitude_update(t, x3, mag_rc):
    """Running-average magnitude update only (refresh-step path)."""
    n, r, lane = x3.shape
    rb, gj = _tiling(r)
    t_arr = jnp.asarray([t], jnp.float32)
    return pl.pallas_call(
        _mag_update_kernel,
        out_shape=jax.ShapeDtypeStruct((r, lane), jnp.float32),
        grid=(gj, n),
        in_specs=[pl.BlockSpec(memory_space=pltpu.MemorySpace.SMEM),
                  pl.BlockSpec((pl.Squeezed(), rb, lane), lambda j, b: (b, j, 0)),
                  pl.BlockSpec((rb, lane), lambda j, b: (j, 0))],
        out_specs=pl.BlockSpec((rb, lane), lambda j, b: (j, 0)),
        compiler_params=pltpu.CompilerParams(
            dimension_semantics=("parallel", "arbitrary")),
    )(t_arr, x3, mag_rc)


def make_mask(threshold, imp_rc):
    """mask = importance >= threshold  (tiny kernel; runs on refresh steps)."""
    r, lane = imp_rc.shape
    rb, gj = _tiling(r)
    thr = jnp.reshape(threshold, (1,)).astype(jnp.float32)
    return pl.pallas_call(
        _make_mask_kernel,
        out_shape=jax.ShapeDtypeStruct((r, lane), jnp.float32),
        grid=(gj,),
        in_specs=[pl.BlockSpec(memory_space=pltpu.MemorySpace.SMEM),
                  pl.BlockSpec((rb, lane), lambda j: (j, 0))],
        out_specs=pl.BlockSpec((rb, lane), lambda j: (j, 0)),
        compiler_params=pltpu.CompilerParams(dimension_semantics=("parallel",)),
    )(thr, imp_rc)


# ----------------------------- glue (plain JAX) --------------------------------

def find_prune_threshold(importance_rc, logical_d, sparsity):
    # TODO(synk): sort/quantile threshold selection has no clean Pallas TPU
    # equivalent; it stays in plain JAX (runs only on rare mask-refresh steps).
    vals = jnp.sort(importance_rc.reshape(-1)[:logical_d])   # exclude lane padding
    idx = max(int(sparsity * logical_d - 1), 0)
    return vals[idx]


# ----------------------------- module ports --------------------------------

class MagnitudePruningCallback:
    """JAX port of qsparse MagnitudePruningCallback (default config:
    running_average=True, no gradient/structure/filter/bernoulli/sp_balance)."""

    def __init__(self, mask_refresh_interval=-1, stop_mask_refresh=float("inf")):
        self.mask_refresh_interval = mask_refresh_interval
        self.stop_mask_refresh = stop_mask_refresh
        self.running_average = True
        self.t = -1                  # mirrors nn.Parameter `t`
        self.magnitude = None        # (R, 128) float32, packed layout

    @property
    def initted(self):
        return self.t != -1

    def initialize(self, mask_rc):
        self.magnitude = jnp.zeros(mask_rc.shape, jnp.float32)

    def __call__(self, x3, logical_d, sparsity, mask_rc, training=True, name=""):
        if not training:
            return broadcast_mul(x3, mask_rc), mask_rc

        if not self.initted:
            self.initialize(mask_rc)
            self.t = 0
            if self.mask_refresh_interval <= 0:
                self.mask_refresh_interval = 1

        t_item = self.t
        do_update = t_item < self.stop_mask_refresh
        do_refresh = (
            sparsity >= 0
            and (t_item % self.mask_refresh_interval == 0
                 and t_item <= self.stop_mask_refresh)
            and (t_item != 0 or name.endswith(".prune"))
        )

        if do_refresh:
            # The threshold sort depends on the *updated* magnitude, so this
            # rare path necessarily reads x twice (stats pass + mask multiply).
            if do_update:
                self.magnitude = magnitude_update(float(t_item), x3, self.magnitude)
            threshold = find_prune_threshold(self.magnitude, logical_d, sparsity)
            mask_rc = make_mask(threshold, self.magnitude)
            out = broadcast_mul(x3, mask_rc)
        elif do_update:
            # Common training step: single fused pass over x.
            out, self.magnitude = fused_mag_update_and_mul(
                float(t_item), x3, mask_rc, self.magnitude)
        else:
            out = broadcast_mul(x3, mask_rc)

        self.t += 1
        return out, mask_rc


class PruneLayer:
    """JAX/Pallas port of qsparse PruneLayer forward (default
    MagnitudePruningCallback, collapse=0, strict=True)."""

    def __init__(self, sparsity=0.5, start=1000, interval=1000, repetition=4,
                 strict=True, callback=None, collapse=0, rampup=False, name=""):
        self.schedules = [start + interval * ((1 if rampup else 0) + i)
                          for i in range(repetition)]
        self.start = start
        self.interval = interval
        self.repetition = repetition
        self.sparsity = sparsity
        self.name = name
        self.callback = callback if callback is not None else MagnitudePruningCallback()
        self.rampup_interval = 0 if rampup else interval
        self._collapse = collapse if isinstance(collapse, list) else [collapse]
        self.strict = strict
        # parameters (mirrors registered nn.Parameters)
        self.mask = None             # (R, 128) float32 of {0,1}, packed layout
        self.mask_shape = None       # original (1, C, H, W)
        self._d = None               # logical C*H*W
        self._r = None
        self._dp = None
        self._n_updates = -1
        self._cur_sparsity = 0.0
        self.training = True

    @property
    def initted(self):
        return self._n_updates != -1

    # ---- packed (R, 128) layout helpers ----
    def _pack(self, x):
        # only collapse=[0] supported (the default); collapse dim must be leading.
        assert self._collapse == [0], "only collapse=0 (batch) is implemented"
        x2 = x.reshape(x.shape[0], -1)
        if x2.shape[1] != self._dp:
            # TODO(synk): ragged feature dims (D % 128 != 0) need one zero-pad
            # pass over x here; the kernels themselves stay lane-dense.
            x2 = jnp.pad(x2, ((0, 0), (0, self._dp - x2.shape[1])))
        return x2.reshape(x.shape[0], self._r, _LANE)

    def _unpack(self, x3, orig_shape):
        x2 = x3.reshape(x3.shape[0], self._dp)
        if self._dp != self._d:
            x2 = x2[:, :self._d]
        return x2.reshape(orig_shape)

    def mask_view(self):
        m = self.mask.reshape(-1)
        if self._dp != self._d:
            m = m[:self._d]
        return m.reshape(self.mask_shape)

    # ---- forward ----
    def __call__(self, x):
        orig_shape = x.shape
        if not self.initted:
            assert len(x.shape) > 1
            mask_shape = [1 if i in self._collapse else s
                          for i, s in enumerate(list(x.shape))]
            self.mask_shape = tuple(mask_shape)
            self._d = int(np.prod(mask_shape))
            self._r, self._dp = _pack_geometry(self._d)
            self.mask = jnp.ones((self._r, _LANE), jnp.float32)   # torch: bool ones
            self._n_updates = 0
            self._cur_sparsity = 0.0

        if (self._n_updates in self.schedules) and self.training:
            ratio = (1.0 - (self._n_updates - self.start + self.rampup_interval)
                     / (self.interval * self.repetition)) ** 3
            self._cur_sparsity = self.sparsity * (1 - ratio)

        if not self.training:
            if self.strict:
                out3 = broadcast_mul(self._pack(x), self.mask)
                return self._unpack(out3, orig_shape)
            raise RuntimeError("")
        else:
            n_updates = self._n_updates
            if n_updates >= self.start:
                x3 = self._pack(x)
                out3, new_mask = self.callback(
                    x3, self._d, self._cur_sparsity, self.mask,
                    training=True, name=self.name)
                self.mask = new_mask
                out = self._unpack(out3, orig_shape)
            else:
                out = x
            self._n_updates += 1
            return out


# ----------------------------- demo / test --------------------------------

if __name__ == "__main__":
    key = jax.random.PRNGKey(0)
    N, C, H, W = 2, 4, 16, 16
    D = C * H * W
    R, Dp = _pack_geometry(D)

    # ---- primitive kernel checks against plain JAX ----
    key, k1, k2, k3 = jax.random.split(key, 4)
    x = jax.nn.relu(jax.random.normal(k1, (N, C, H, W), jnp.float32))
    x3 = x.reshape(N, R, _LANE)
    mask_rc = (jax.random.uniform(k2, (R, _LANE)) > 0.3).astype(jnp.float32)
    mag_rc = jax.random.uniform(k3, (R, _LANE), dtype=jnp.float32)

    out_b = broadcast_mul(x3, mask_rc)
    np.testing.assert_allclose(np.asarray(out_b), np.asarray(x3 * mask_rc),
                               rtol=1e-6, atol=1e-6)

    t = 3.0
    ref_mag = (t * mag_rc + jnp.mean(jnp.abs(x3), axis=0)) / (t + 1.0)
    out_f, mag_f = fused_mag_update_and_mul(t, x3, mask_rc, mag_rc)
    np.testing.assert_allclose(np.asarray(out_f), np.asarray(x3 * mask_rc),
                               rtol=1e-6, atol=1e-6)
    np.testing.assert_allclose(np.asarray(mag_f), np.asarray(ref_mag),
                               rtol=1e-5, atol=1e-6)

    mag_u = magnitude_update(t, x3, mag_rc)
    np.testing.assert_allclose(np.asarray(mag_u), np.asarray(ref_mag),
                               rtol=1e-5, atol=1e-6)

    m_new = make_mask(jnp.float32(0.5), mag_rc)
    np.testing.assert_allclose(np.asarray(m_new),
                               np.asarray((mag_rc >= 0.5).astype(jnp.float32)))

    # ---- end-to-end PruneLayer demo ----
    layer = PruneLayer(sparsity=0.5, start=2, interval=2, repetition=2,
                       strict=True, collapse=0, name="")

    # training steps (relu activations, like a typical qsparse activation prune site)
    layer.training = True
    for _ in range(6):
        key, sub = jax.random.split(key)
        xi = jax.nn.relu(jax.random.normal(sub, (N, C, H, W), jnp.float32))
        out = layer(xi)

    # eval / inference: strict broadcast mask multiply (the Pallas hot path)
    layer.training = False
    key, sub = jax.random.split(key)
    xe = jax.nn.relu(jax.random.normal(sub, (N, C, H, W), jnp.float32))
    oe = jax.block_until_ready(layer(xe))

    ref = xe * layer.mask_view()
    np.testing.assert_allclose(np.asarray(oe), np.asarray(ref),
                               rtol=1e-6, atol=1e-6)

    print("KERNEL_OK")
</pallas_src>

<mosaic_0001>
module attributes {stable_mosaic.version = 11 : i64} {
  func.func @_bmul_kernel(%arg0: i32, %arg1: i32, %arg2: memref<1x8x128xf32, #tpu.memory_space<vmem>>, %arg3: memref<8x128xf32, #tpu.memory_space<vmem>>, %arg4: memref<1x8x128xf32, #tpu.memory_space<vmem>>) attributes {dimension_semantics = [#tpu.dimension_semantics<parallel>, #tpu.dimension_semantics<parallel>], iteration_bounds = array<i64: 1, 2>, scalar_prefetch = 0 : i64, scratch_operands = 0 : i64, tpu.core_type = #tpu.core_type<tc>, window_params = [{transform_indices = @transform_0, window_bounds = array<i64: 1, 8, 128>}, {transform_indices = @transform_1, window_bounds = array<i64: 8, 128>}, {transform_indices = @transform_2, window_bounds = array<i64: 1, 8, 128>}]} {
    %c0 = arith.constant 0 : index
    %c0_0 = arith.constant 0 : index
    %c0_1 = arith.constant 0 : index
    %0 = vector.load %arg2[%c0, %c0_0, %c0_1] : memref<1x8x128xf32, #tpu.memory_space<vmem>>, vector<1x8x128xf32>
    %1 = vector.shape_cast %0 : vector<1x8x128xf32> to vector<8x128xf32>
    %c0_2 = arith.constant 0 : index
    %c0_3 = arith.constant 0 : index
    %2 = vector.load %arg3[%c0_2, %c0_3] : memref<8x128xf32, #tpu.memory_space<vmem>>, vector<8x128xf32>
    %3 = arith.mulf %1, %2 : vector<8x128xf32>
    %c0_4 = arith.constant 0 : index
    %c0_5 = arith.constant 0 : index
    %c0_6 = arith.constant 0 : index
    %4 = vector.load %arg4[%c0_4, %c0_5, %c0_6] : memref<1x8x128xf32, #tpu.memory_space<vmem>>, vector<1x8x128xf32>
    %5 = vector.shape_cast %4 : vector<1x8x128xf32> to vector<8x128xf32>
    %6 = vector.shape_cast %3 : vector<8x128xf32> to vector<1x8x128xf32>
    tpu.vector_store %arg4[%c0_4, %c0_5, %c0_6], %6 {strides = array<i32>} : memref<1x8x128xf32, #tpu.memory_space<vmem>>, vector<1x8x128xf32>,
    return
  }
  func.func @transform_0(%arg0: i32, %arg1: i32) -> (i32, i32, i32) {
    %c0_i32 = arith.constant 0 : i32
    %c0_i32_0 = arith.constant 0 : i32
    return %arg1, %arg0, %c0_i32 : i32, i32, i32
  }
  func.func @transform_1(%arg0: i32, %arg1: i32) -> (i32, i32) {
    %c0_i32 = arith.constant 0 : i32
    %c0_i32_0 = arith.constant 0 : i32
    return %arg0, %c0_i32 : i32, i32
  }
  func.func @transform_2(%arg0: i32, %arg1: i32) -> (i32, i32, i32) {
    %c0_i32 = arith.constant 0 : i32
    %c0_i32_0 = arith.constant 0 : i32
    return %arg1, %arg0, %c0_i32 : i32, i32, i32
  }
}

</mosaic_0001>

<llo_original>
// kernel: tpu_custom_call.1
$region0: #{tpu_custom_call.1}
  #allocation0 [shape = 'u32[]', space=smem, size = 0x4, offset = 0x4, fixed_abs, tag = 'smem constant byte address 0x4 - core index']
  #allocation1 [shape = 'u32[144,128]{1,0:T(1,128)}', space=vmem, size = 0x12000, scoped, tag = 'internal scratch']
  %s0 = inlined_call_operand.hbm [shape: f32[2,8,128], index: 0, kind: input, shape index: {}]
  %s1 = inlined_call_operand.hbm [shape: f32[8,128], index: 1, kind: input, shape index: {}]
  %s2 = inlined_call_operand.hbm [shape: f32[2,8,128], index: 2, kind: output, shape index: {}]
  %s3 = sld [smem:[#allocation0]]
  $region49: #{tpu_custom_call.1} parent=0
    _
  %s5 = ssub.s32 1, %s3
  %s6 = scalar_select 0, %s5, %s3
  $region1: #{tpu_custom_call.1} parent=0
    #allocation2 [shape = 'u8[8192]{0}', space=vmem, size = 0x2000, scoped, tag = 'input window, operand 0']
    #allocation3 [shape = 's32[2]{0}', space=sflag, size = 0x8, scoped, tag = 'scoped memory for tpu_custom_call.1']
    #allocation4 [shape = 's32[2]{0}', space=sflag, size = 0x8, scoped, tag = 'scoped memory for tpu_custom_call.1']
    #allocation5 [shape = 'u8[4096]{0}', space=vmem, size = 0x1000, scoped, tag = 'input window, operand 1, single buffered']
    #allocation6 [shape = 's32[1]{0}', space=sflag, size = 0x4, scoped, tag = 'scoped memory for tpu_custom_call.1']
    #allocation7 [shape = 'u8[8192]{0}', space=vmem, size = 0x2000, scoped, tag = 'output window, operand 0']
    %7 = vsyncpa [#allocation3], 0
    %s8 = scalar_lea.sflag [#allocation3], 1
    %9 = vsyncpa %s8, 0
    %10 = vsyncpa [#allocation6], 0
    %11 = vsyncpa [#allocation4], 0
    %s12 = scalar_lea.sflag [#allocation4], 1
    %13 = vsyncpa %s12, 0
    loop: start=0, step=1, limit=4
    $region2: #{tpu_custom_call.1} parent=1 // loop_pre_header
      _
    $region3: #{tpu_custom_call.1} parent=1 // loop_header
      %s15 = sphi 0, %s19
      %p16 = scmp.ge.s32.totalorder %s15, 4
      %s22 = sphi 0, %s34
      %s23 = sphi 0, %s30
      %s24 = sphi 0, %s22
      %s25 = sphi 0, %s23
      %s26 = sphi 0, %s24
      %s27 = sphi 0, %s25
      %s39 = sphi 0, %s41
      %s42 = sphi 0, %s39
      %s43 = sphi 0, %s42
      %s59 = sphi 0, %s43
      %s65 = sphi 0, %s67
      %s68 = sphi 0, %s65
      %s69 = sphi 0, %s68
      %s85 = sphi 0, %s69
      %s93 = sphi 0, %s95
      %s96 = sphi 0, %s93
      %s97 = sphi 0, %s96
      %s113 = sphi 0, %s97
    $region4: #{tpu_custom_call.1} parent=1 // loop_header_branch
      %18 = sbr.rel (%p16) target = $region8
    $region5: #{tpu_custom_call.1} parent=1 // loop_body
      %s20 = ssub.s32 %s15, 1
      %s21 = ssub.s32 %s15, 2
      %s28 = sadd.s32 1, %s23
      %p29 = scmp.ge.s32.totalorder %s28, 2
      %s30 = scalar_select %p29, 0, %s28
      %s31 = sadd.s32 1, %s22
      %s32 = scalar_select %p29, %s31, %s22
      %p33 = scmp.ge.s32.totalorder %s32, 1
      %s34 = scalar_select %p33, 0, %s32
      %s35 = ssub.s32 %s23, %s30
      %s36 = ssub.s32 %s22, %s34
      %s37 = sor.u32 %s35, %s36
      %p38 = scmp.eq.s32.totalorder %s37, 0
      %s40 = sadd.s32 %s39, 1
      %s41 = scalar_select %p38, %s39, %s40
      %p44 = pneg %p38
      %p45 = scmp.eq.s32.totalorder %s15, 1
      %p46 = por %p44, %p45
      %p47 = scmp.ne.s32.totalorder %s39, %s42
      %p48 = scmp.eq.s32.totalorder %s15, 0
      %p49 = por %p47, %p48
      %p50 = scmp.ne.s32.totalorder %s39, %s42
      %p51 = scmp.eq.s32.totalorder %s20, 1
      %p52 = por %p50, %p51
      %p53 = scmp.ne.s32.totalorder %s42, %s43
      %p54 = scmp.eq.s32.totalorder %s20, 0
      %p55 = por %p53, %p54
      %p56 = scmp.ne.s32.totalorder %s42, %s43
      %p57 = scmp.eq.s32.totalorder %s21, 1
      %p58 = por %p56, %p57
      %p60 = scmp.ne.s32.totalorder %s43, %s59
      %p61 = scmp.eq.s32.totalorder %s21, 0
      %p62 = por %p60, %p61
      %s63 = ssub.s32 %s22, %s34
      %p64 = scmp.eq.s32.totalorder %s63, 0
      %s66 = sadd.s32 %s65, 1
      %s67 = scalar_select %p64, %s65, %s66
      %p70 = pneg %p64
      %p71 = scmp.eq.s32.totalorder %s15, 1
      %p72 = por %p70, %p71
      %p73 = scmp.ne.s32.totalorder %s65, %s68
      %p74 = scmp.eq.s32.totalorder %s15, 0
      %p75 = por %p73, %p74
      %p76 = scmp.ne.s32.totalorder %s65, %s68
      %p77 = scmp.eq.s32.totalorder %s20, 1
      %p78 = por %p76, %p77
      %p79 = scmp.ne.s32.totalorder %s68, %s69
      %p80 = scmp.eq.s32.totalorder %s20, 0
      %p81 = por %p79, %p80
      %p82 = scmp.ne.s32.totalorder %s68, %s69
      %p83 = scmp.eq.s32.totalorder %s21, 1
      %p84 = por %p82, %p83
      %p86 = scmp.ne.s32.totalorder %s69, %s85
      %p87 = scmp.eq.s32.totalorder %s21, 0
      %p88 = por %p86, %p87
      %s89 = ssub.s32 %s23, %s30
      %s90 = ssub.s32 %s22, %s34
      %s91 = sor.u32 %s89, %s90
      %p92 = scmp.eq.s32.totalorder %s91, 0
      %s94 = sadd.s32 %s93, 1
      %s95 = scalar_select %p92, %s93, %s94
      %p98 = pneg %p92
      %p99 = scmp.eq.s32.totalorder %s15, 1
      %p100 = por %p98, %p99
      %p101 = scmp.ne.s32.totalorder %s93, %s96
      %p102 = scmp.eq.s32.totalorder %s15, 0
      %p103 = por %p101, %p102
      %p104 = scmp.ne.s32.totalorder %s93, %s96
      %p105 = scmp.eq.s32.totalorder %s20, 1
      %p106 = por %p104, %p105
      %p107 = scmp.ne.s32.totalorder %s96, %s97
      %p108 = scmp.eq.s32.totalorder %s20, 0
      %p109 = por %p107, %p108
      %p110 = scmp.ne.s32.totalorder %s96, %s97
      %p111 = scmp.eq.s32.totalorder %s21, 1
      %p112 = por %p110, %p111
      %p114 = scmp.ne.s32.totalorder %s97, %s113
      %p115 = scmp.eq.s32.totalorder %s21, 0
      %p116 = por %p114, %p115
      %p117 = scmp.le.s32.totalorder 1, %s15
      %p118 = scmp.lt.s32.totalorder %s15, 3
      %p119 = pnand %p117, %p118
      %p120 = pneg %p119
      // Predicated region
      $region9: #{tpu_custom_call.1} parent=5 // pred_check
        _
      $region10: #{tpu_custom_call.1} parent=5 // pred_check_branch
        %122 = sbr.rel (%p119) target = $region12
      $region11: #{tpu_custom_call.1} parent=5 // pred_region
        %s123 = ssub.s32 %s15, 1
        // Predicated region
        $region13: #{tpu_custom_call.1} parent=11 // pred_check
          %p124 = pneg %p81
        $region14: #{tpu_custom_call.1} parent=11 // pred_check_branch
          %126 = sbr.rel (%p124) target = $region16
        $region15: #{tpu_custom_call.1} parent=11 // pred_region
          %s128 = ssub.s32 128, 128
          %129 = vsyncadd [#allocation6], %s128
          %s130 = smul.addr %s24, 128
          %s131 = scalar_lea.hbm %s1, %s130
          %s133 = sshll.u32 [#allocation5], 4
          %s134 = int_to_ptr.vmem [resolvable:$true] %s133
          %136 = dma.hbm_to_vmem [thread:$0]  %s131, 128, %s134, [#allocation6]
        $region16: #{tpu_custom_call.1} parent=11 // pred_fallthru
          _
      $region12: #{tpu_custom_call.1} parent=5 // pred_fallthru
        _
      %p137 = scmp.lt.s32.totalorder %s15, 2
      // Predicated region
      $region17: #{tpu_custom_call.1} parent=5 // pred_check
        %p138 = pneg %p137
      $region18: #{tpu_custom_call.1} parent=5 // pred_check_branch
        %140 = sbr.rel (%p138) target = $region20
      $region19: #{tpu_custom_call.1} parent=5 // pred_region
        // Predicated region
        $region21: #{tpu_custom_call.1} parent=19 // pred_check
          %p141 = pneg %p49
        $region22: #{tpu_custom_call.1} parent=19 // pred_check_branch
          %143 = sbr.rel (%p141) target = $region24
        $region23: #{tpu_custom_call.1} parent=19 // pred_region
          %s144 = sand.u32 %s39, 1
          %s145 = scalar_lea.sflag [#allocation3], %s144
          %s146 = sand.u32 %s39, 1
          %s147 = smul.addr %s146, 8
          %s148 = scalar_lea.vmem [#allocation2], %s147
          %s150 = ssub.s32 128, 128
          %151 = vsyncadd %s145, %s150
          %s152 = sadd.s32 %s22, %s23
          %s153 = smul.addr %s152, 128
          %s154 = scalar_lea.hbm %s0, %s153
          %s156 = sshll.u32 %s148, 4
          %s157 = int_to_ptr.vmem [resolvable:$true] %s156
          %159 = dma.hbm_to_vmem [thread:$0]  %s154, 128, %s157, %s145
        $region24: #{tpu_custom_call.1} parent=19 // pred_fallthru
          _
      $region20: #{tpu_custom_call.1} parent=5 // pred_fallthru
        _
      %p160 = scmp.le.s32.totalorder 1, %s15
      %p161 = scmp.lt.s32.totalorder %s15, 3
      %p162 = pnand %p160, %p161
      %p163 = pneg %p162
      // Predicated region
      $region25: #{tpu_custom_call.1} parent=5 // pred_check
        _
      $region26: #{tpu_custom_call.1} parent=5 // pred_check_branch
        %165 = sbr.rel (%p162) target = $region28
      $region27: #{tpu_custom_call.1} parent=5 // pred_region
        %s166 = ssub.s32 %s15, 1
        %s167 = sand.u32 %s42, 1
        %s168 = scalar_lea.sflag [#allocation3], %s167
        %s169 = sand.u32 %s42, 1
        %s170 = smul.addr %s169, 8
        %s171 = scalar_lea.vmem [#allocation2], %s170
        // Predicated region
        $region29: #{tpu_custom_call.1} parent=27 // pred_check
          %p172 = pneg %p55
        $region30: #{tpu_custom_call.1} parent=27 // pred_check_branch
          %174 = sbr.rel (%p172) target = $region32
        $region31: #{tpu_custom_call.1} parent=27 // pred_region
          %175 = dma.done %s168, 128
        $region32: #{tpu_custom_call.1} parent=27 // pred_fallthru
          _
        // Predicated region
        $region33: #{tpu_custom_call.1} parent=27 // pred_check
          %p176 = pneg %p81
        $region34: #{tpu_custom_call.1} parent=27 // pred_check_branch
          %178 = sbr.rel (%p176) target = $region36
        $region35: #{tpu_custom_call.1} parent=27 // pred_region
          %179 = dma.done [#allocation6], 128
        $region36: #{tpu_custom_call.1} parent=27 // pred_fallthru
          _
        %s180 = sand.u32 %s42, 1
        %s181 = scalar_lea.sflag [#allocation3], %s180
        %s182 = sand.u32 %s42, 1
        %s183 = smul.addr %s182, 8
        %s184 = scalar_lea.vmem [#allocation2], %s183
        %p185 = pneg %p55
        %p186 = pneg %p52
        %p187 = pneg %p81
        %p188 = pneg %p78
        %p189 = pneg %p109
        %p190 = pneg %p106
        %s191 = sand.u32 %s96, 1
        %s192 = scalar_lea.sflag [#allocation4], %s191
        %s193 = sand.u32 %s96, 1
        %s194 = smul.addr %s193, 8
        %s195 = scalar_lea.vmem [#allocation7], %s194
        %v196 = vld [vmem:[%s171] sm:$0xff]
        %v197 = vld [vmem:[#allocation5] sm:$0xff]
        %v198 = vmul.f32 %v196, %v197
        %199 = vst [vmem:[%s195] sm:$0xff] %v198
        %s200 = sand.u32 %s96, 1
        %s201 = scalar_lea.sflag [#allocation4], %s200
        %s202 = sand.u32 %s96, 1
        %s203 = smul.addr %s202, 8
        %s204 = scalar_lea.vmem [#allocation7], %s203
        // Predicated region
        $region37: #{tpu_custom_call.1} parent=27 // pred_check
          %p205 = pneg %p106
        $region38: #{tpu_custom_call.1} parent=27 // pred_check_branch
          %207 = sbr.rel (%p205) target = $region40
        $region39: #{tpu_custom_call.1} parent=27 // pred_region
          %s209 = ssub.s32 128, 128
          %210 = vsyncadd %s201, %s209
          %s211 = sadd.s32 %s24, %s25
          %s212 = smul.addr %s211, 128
          %s213 = scalar_lea.hbm %s2, %s212
          %s215 = sshll.u32 %s204, 4
          %s216 = int_to_ptr.vmem [resolvable:$true] %s215
          %218 = dma.vmem_to_hbm [thread:$0]  %s216, 128, %s213, %s201
        $region40: #{tpu_custom_call.1} parent=27 // pred_fallthru
          _
      $region28: #{tpu_custom_call.1} parent=5 // pred_fallthru
        _
      %p219 = scmp.le.s32.totalorder 2, %s15
      // Predicated region
      $region41: #{tpu_custom_call.1} parent=5 // pred_check
        %p220 = pneg %p219
      $region42: #{tpu_custom_call.1} parent=5 // pred_check_branch
        %222 = sbr.rel (%p220) target = $region44
      $region43: #{tpu_custom_call.1} parent=5 // pred_region
        %s223 = ssub.s32 %s15, 2
        // Predicated region
        $region45: #{tpu_custom_call.1} parent=43 // pred_check
          %p224 = pneg %p112
        $region46: #{tpu_custom_call.1} parent=43 // pred_check_branch
          %226 = sbr.rel (%p224) target = $region48
        $region47: #{tpu_custom_call.1} parent=43 // pred_region
          %s227 = sand.u32 %s97, 1
          %s228 = scalar_lea.sflag [#allocation4], %s227
          %s229 = sand.u32 %s97, 1
          %s230 = smul.addr %s229, 8
          %s231 = scalar_lea.vmem [#allocation7], %s230
          %232 = dma.done %s228, 128
        $region48: #{tpu_custom_call.1} parent=43 // pred_fallthru
          _
      $region44: #{tpu_custom_call.1} parent=5 // pred_fallthru
        _
    $region6: #{tpu_custom_call.1} parent=1 // loop_footer
      %s19 = sadd.s32 1, %s15
    $region7: #{tpu_custom_call.1} parent=1 // loop_footer_branch
      %14 = sbr.rel target = $region3
    $region8: #{tpu_custom_call.1} parent=1 // loop_exit
      _
    %233 = vsyncpa [#allocation3], 1
    %s234 = scalar_lea.sflag [#allocation3], 1
    %235 = vsyncpa %s234, 1
    %236 = vsyncpa [#allocation6], 1
    %237 = vsyncpa [#allocation4], 1
    %s238 = scalar_lea.sflag [#allocation4], 1
    %239 = vsyncpa %s238, 1

</llo_original>
